<compile_context>
chip_gen: v6e
topology: v6e:2x2x1
jax: 0.10.0
libtpu: 0.0.40
codegen_flags: <defaults>
</compile_context>

<pallas_src>
import jax
import jax.numpy as jnp
from jax.experimental import pallas as pl
from jax.experimental.pallas import tpu as pltpu


# ----------------------------------------------------------------------------
# Packed parameter layouts
# ----------------------------------------------------------------------------
# p_vec (f32, 128 x 8) -- per-feature column vectors for the VPU path:
#   col 0: b2 (128)     col 1: w1 (64)      col 2: b1 (64)
#   col 3: b3 (64)      col 4: b4 (32)      col 5: w5^T (32)   col 6 row 0: b5
_VEC_ROWS, _VEC_COLS = 128, 8
# p_mx (MXU dtype, 224 x 128) -- matmul weight slabs in PyTorch (out,in) layout:
#   rows   0:128, cols 0: 64 -> W2 (128, 64)
#   rows 128:192, cols 0:128 -> W3 ( 64,128)
#   rows 192:224, cols 0: 64 -> W4 ( 32, 64)
_MX_ROWS, _MX_COLS = 224, 128

# MACs per sample (for the cost estimate).
_MACS_PER_SAMPLE = 1 * 64 + 64 * 128 + 128 * 64 + 64 * 32 + 32 * 1


def _round_up(n, m):
    return ((n + m - 1) // m) * m


def _make_kernel(mxu_dtype):
    def kernel(x_ref, pv_ref, pm_ref, o_ref):
        # x_ref: (1, TB) -- batch along lanes, f32.
        x = x_ref[...]

        # fc1 + ReLU : K=1 contraction -> pure VPU outer product (f32).
        w1 = pv_ref[0:64, 1:2]                                  # (64, 1)
        b1 = pv_ref[0:64, 2:3]                                  # (64, 1)
        h = jnp.maximum(w1 * x + b1, 0.0)                       # (64, TB) f32

        # fc2 + ReLU : (128,64) @ (64,TB) on the MXU, f32 accumulate.
        w2 = pm_ref[0:128, 0:64]                                # (128, 64) mxu_dtype
        b2 = pv_ref[0:128, 0:1]                                 # (128, 1)  f32
        h = jnp.dot(w2, h.astype(mxu_dtype),
                    preferred_element_type=jnp.float32)
        h = jnp.maximum(h + b2, 0.0)                            # (128, TB) f32

        # dropout(p=0.5): eval/inference mode == identity.
        # TODO(synk): training-mode dropout via pltpu.prng_random_bits if needed.

        # fc3 + ReLU : (64,128) @ (128,TB).
        w3 = pm_ref[128:192, 0:128]                             # (64, 128) mxu_dtype
        b3 = pv_ref[0:64, 3:4]                                  # (64, 1)   f32
        h = jnp.dot(w3, h.astype(mxu_dtype),
                    preferred_element_type=jnp.float32)
        h = jnp.maximum(h + b3, 0.0)                            # (64, TB) f32

        # fc4 + ReLU : (32,64) @ (64,TB).
        w4 = pm_ref[192:224, 0:64]                              # (32, 64) mxu_dtype
        b4 = pv_ref[0:32, 4:5]                                  # (32, 1)  f32
        h = jnp.dot(w4, h.astype(mxu_dtype),
                    preferred_element_type=jnp.float32)
        h = jnp.maximum(h + b4, 0.0)                            # (32, TB) f32

        # output layer: 1 feature -> VPU multiply + sublane reduce (f32),
        # yields a lane-dense (1, TB) row (no M=1 MXU round-trip).
        w5 = pv_ref[0:32, 5:6]                                  # (32, 1)
        b5 = pv_ref[0:1, 6:7]                                   # (1, 1)
        out = jnp.sum(h * w5, axis=0, keepdims=True) + b5       # (1, TB)
        o_ref[...] = out.astype(o_ref.dtype)

    return kernel


def mlp_forward(x, packed_params, *, tb=2048):
    """x: (B, 1) float32; packed_params: (p_vec, p_mx) from pack_params()."""
    p_vec, p_mx = packed_params
    B = x.shape[0]

    xr = x.reshape(1, B).astype(jnp.float32)      # batch on the lane axis
    Bp = B
    if B < 128:
        # Tiny batches: pad up to one lane tile (negligible copy). For B >= 128
        # we skip the pad and let Pallas mask the ragged boundary block.
        Bp = 128
        xr = jnp.pad(xr, ((0, 0), (0, Bp - B)))

    tb_eff = max(128, min(tb, _round_up(Bp, 128)))
    # Keep >= 2 grid steps for large batches so dimension_semantics=("parallel",)
    # can shard the batch axis across both TensorCores on v7x.
    if Bp > 1024 and pl.cdiv(Bp, tb_eff) < 2:
        tb_eff = _round_up(pl.cdiv(Bp, 2), 128)
    nb = pl.cdiv(Bp, tb_eff)

    cost = pl.CostEstimate(
        flops=2 * _MACS_PER_SAMPLE * Bp,
        transcendentals=0,
        bytes_accessed=int(8 * Bp + p_vec.size * 4
                           + p_mx.size * p_mx.dtype.itemsize),
    )

    out = pl.pallas_call(
        _make_kernel(p_mx.dtype),
        out_shape=jax.ShapeDtypeStruct((1, Bp), jnp.float32),
        grid=(nb,),
        in_specs=[
            pl.BlockSpec((1, tb_eff), lambda i: (0, i)),              # x tile
            pl.BlockSpec((_VEC_ROWS, _VEC_COLS), lambda i: (0, 0)),   # VPU params (resident)
            pl.BlockSpec((_MX_ROWS, _MX_COLS), lambda i: (0, 0)),     # MXU weights (resident)
        ],
        out_specs=pl.BlockSpec((1, tb_eff), lambda i: (0, i)),
        compiler_params=pltpu.CompilerParams(
            dimension_semantics=("parallel",)),
        cost_estimate=cost,
    )(xr, p_vec, p_mx)

    return out[0, :B].reshape(B, 1)


# ----------------------------------------------------------------------------
# Parameter construction / packing / reference
# ----------------------------------------------------------------------------
def init_params(key):
    """PyTorch-style Linear params: W (out,in), b (out,), U(-1/sqrt(in), 1/sqrt(in))."""
    dims = [(1, 64), (64, 128), (128, 64), (64, 32), (32, 1)]  # (in, out)
    params = []
    for i, (d_in, d_out) in enumerate(dims):
        kw, kb = jax.random.split(jax.random.fold_in(key, i))
        bound = 1.0 / (d_in ** 0.5)
        w = jax.random.uniform(kw, (d_out, d_in), jnp.float32, -bound, bound)
        b = jax.random.uniform(kb, (d_out,), jnp.float32, -bound, bound)
        params.append((w, b))
    return params


def pack_params(params, mxu_dtype=jnp.bfloat16):
    (w1, b1), (w2, b2), (w3, b3), (w4, b4), (w5, b5) = params

    pv = jnp.zeros((_VEC_ROWS, _VEC_COLS), jnp.float32)
    pv = pv.at[0:128, 0].set(b2)
    pv = pv.at[0:64, 1].set(w1[:, 0])
    pv = pv.at[0:64, 2].set(b1)
    pv = pv.at[0:64, 3].set(b3)
    pv = pv.at[0:32, 4].set(b4)
    pv = pv.at[0:32, 5].set(w5[0, :])
    pv = pv.at[0, 6].set(b5[0])

    pm = jnp.zeros((_MX_ROWS, _MX_COLS), jnp.float32)
    pm = pm.at[0:128, 0:64].set(w2)
    pm = pm.at[128:192, 0:128].set(w3)
    pm = pm.at[192:224, 0:64].set(w4)
    return pv, pm.astype(mxu_dtype)


def reference_forward(x, params, mxu_dtype=jnp.float32):
    """Pure-JAX reference. Casts the fc2/fc3/fc4 dot operands to mxu_dtype to
    mirror the kernel's MXU precision; fc1 and the output layer stay f32."""
    (w1, b1), (w2, b2), (w3, b3), (w4, b4), (w5, b5) = params

    def mm(h, w):
        return jnp.dot(h.astype(mxu_dtype), w.T.astype(mxu_dtype),
                       preferred_element_type=jnp.float32)

    h = jnp.maximum(x @ w1.T + b1, 0.0)
    h = jnp.maximum(mm(h, w2) + b2, 0.0)
    # dropout: identity (eval mode)
    h = jnp.maximum(mm(h, w3) + b3, 0.0)
    h = jnp.maximum(mm(h, w4) + b4, 0.0)
    return h @ w5.T + b5


if __name__ == "__main__":
    key = jax.random.PRNGKey(0)
    k_x, k_p = jax.random.split(key)

    params = init_params(k_p)
    packed_bf16 = pack_params(params, jnp.bfloat16)
    packed_f32 = pack_params(params, jnp.float32)

    # 1) Small batch (B=8 -> padded to one 128-lane tile), bf16 MXU path.
    B = 8
    x = jax.random.normal(k_x, (B, 1), jnp.float32)
    out = jax.block_until_ready(mlp_forward(x, packed_bf16))
    ref = reference_forward(x, params, jnp.bfloat16)
    assert out.shape == (B, 1)
    assert jnp.allclose(out, ref, atol=2e-2, rtol=2e-2), "mismatch (B=8, bf16)"

    # 2) Ragged multi-block grid (B=1000, tb=512 -> 2 steps, partial last block), f32 path.
    B2 = 1000
    x2 = jax.random.normal(jax.random.fold_in(k_x, 1), (B2, 1), jnp.float32)
    out2 = jax.block_until_ready(mlp_forward(x2, packed_f32, tb=512))
    ref2 = reference_forward(x2, params, jnp.float32)
    assert out2.shape == (B2, 1)
    assert jnp.allclose(out2, ref2, atol=1e-4, rtol=1e-4), "mismatch (B=1000, f32)"

    # 3) Larger batch with the default tiling (tb=2048 -> 2 grid steps), bf16 path.
    B3 = 4096
    x3 = jax.random.normal(jax.random.fold_in(k_x, 2), (B3, 1), jnp.float32)
    out3 = jax.block_until_ready(mlp_forward(x3, packed_bf16))
    ref3 = reference_forward(x3, params, jnp.bfloat16)
    assert out3.shape == (B3, 1)
    assert jnp.allclose(out3, ref3, atol=2e-2, rtol=2e-2), "mismatch (B=4096, bf16)"

    print("KERNEL_OK")
</pallas_src>

<mosaic_0001>
module attributes {stable_mosaic.version = 11 : i64} {
  func.func @kernel(%arg0: i32, %arg1: memref<1x128xf32, #tpu.memory_space<vmem>>, %arg2: memref<128x8xf32, #tpu.memory_space<vmem>>, %arg3: memref<224x128xbf16, #tpu.memory_space<vmem>>, %arg4: memref<1x128xf32, #tpu.memory_space<vmem>>) attributes {dimension_semantics = [#tpu.dimension_semantics<parallel>], iteration_bounds = array<i64: 1>, scalar_prefetch = 0 : i64, scratch_operands = 0 : i64, tpu.core_type = #tpu.core_type<tc>, window_params = [{transform_indices = @transform_0, window_bounds = array<i64: 1, 128>}, {pipeline_mode = #tpu.pipeline_mode<synchronous>, transform_indices = @transform_1, window_bounds = array<i64: 128, 8>}, {pipeline_mode = #tpu.pipeline_mode<synchronous>, transform_indices = @transform_2, window_bounds = array<i64: 224, 128>}, {transform_indices = @transform_3, window_bounds = array<i64: 1, 128>}]} {
    %c0 = arith.constant 0 : index
    %c0_0 = arith.constant 0 : index
    %0 = vector.load %arg1[%c0, %c0_0] : memref<1x128xf32, #tpu.memory_space<vmem>>, vector<1x128xf32>
    %c0_1 = arith.constant 0 : index
    %c1 = arith.constant 1 : index
    %1 = vector.load %arg2[%c0_1, %c1] : memref<128x8xf32, #tpu.memory_space<vmem>>, vector<64x1xf32>
    %c0_2 = arith.constant 0 : index
    %c2 = arith.constant 2 : index
    %2 = vector.load %arg2[%c0_2, %c2] : memref<128x8xf32, #tpu.memory_space<vmem>>, vector<64x1xf32>
    %3 = vector.broadcast %1 : vector<64x1xf32> to vector<64x128xf32>
    %4 = vector.broadcast %0 : vector<1x128xf32> to vector<64x128xf32>
    %5 = arith.mulf %3, %4 : vector<64x128xf32>
    %6 = vector.broadcast %2 : vector<64x1xf32> to vector<64x128xf32>
    %7 = arith.addf %5, %6 : vector<64x128xf32>
    %cst = arith.constant 0.000000e+00 : f32
    %8 = vector.broadcast %cst : f32 to vector<64x128xf32>
    %9 = arith.maximumf %7, %8 : vector<64x128xf32>
    %c0_3 = arith.constant 0 : index
    %c0_4 = arith.constant 0 : index
    %10 = vector.load %arg3[%c0_3, %c0_4] : memref<224x128xbf16, #tpu.memory_space<vmem>>, vector<128x64xbf16>
    %c0_5 = arith.constant 0 : index
    %c0_6 = arith.constant 0 : index
    %11 = vector.load %arg2[%c0_5, %c0_6] : memref<128x8xf32, #tpu.memory_space<vmem>>, vector<128x1xf32>
    %12 = arith.truncf %9 : vector<64x128xf32> to vector<64x128xbf16>
    %cst_7 = arith.constant dense<0.000000e+00> : vector<128x128xf32>
    %13 = tpu.matmul %10, %12, %cst_7 {dimension_numbers = #tpu.dot_dimension_numbers<[1], [0], [0], [1], [0, 0, 1, 1], [], []>} : vector<128x64xbf16>, vector<64x128xbf16>, vector<128x128xf32> -> vector<128x128xf32>
    %14 = vector.broadcast %11 : vector<128x1xf32> to vector<128x128xf32>
    %15 = arith.addf %13, %14 : vector<128x128xf32>
    %cst_8 = arith.constant 0.000000e+00 : f32
    %16 = vector.broadcast %cst_8 : f32 to vector<128x128xf32>
    %17 = arith.maximumf %15, %16 : vector<128x128xf32>
    %c128 = arith.constant 128 : index
    %c0_9 = arith.constant 0 : index
    %18 = vector.load %arg3[%c128, %c0_9] : memref<224x128xbf16, #tpu.memory_space<vmem>>, vector<64x128xbf16>
    %c0_10 = arith.constant 0 : index
    %c3 = arith.constant 3 : index
    %19 = vector.load %arg2[%c0_10, %c3] : memref<128x8xf32, #tpu.memory_space<vmem>>, vector<64x1xf32>
    %20 = arith.truncf %17 : vector<128x128xf32> to vector<128x128xbf16>
    %cst_11 = arith.constant dense<0.000000e+00> : vector<64x128xf32>
    %21 = tpu.matmul %18, %20, %cst_11 {dimension_numbers = #tpu.dot_dimension_numbers<[1], [0], [0], [1], [0, 0, 1, 1], [], []>} : vector<64x128xbf16>, vector<128x128xbf16>, vector<64x128xf32> -> vector<64x128xf32>
    %22 = vector.broadcast %19 : vector<64x1xf32> to vector<64x128xf32>
    %23 = arith.addf %21, %22 : vector<64x128xf32>
    %cst_12 = arith.constant 0.000000e+00 : f32
    %24 = vector.broadcast %cst_12 : f32 to vector<64x128xf32>
    %25 = arith.maximumf %23, %24 : vector<64x128xf32>
    %c192 = arith.constant 192 : index
    %c0_13 = arith.constant 0 : index
    %26 = vector.load %arg3[%c192, %c0_13] : memref<224x128xbf16, #tpu.memory_space<vmem>>, vector<32x64xbf16>
    %c0_14 = arith.constant 0 : index
    %c4 = arith.constant 4 : index
    %27 = vector.load %arg2[%c0_14, %c4] : memref<128x8xf32, #tpu.memory_space<vmem>>, vector<32x1xf32>
    %28 = arith.truncf %25 : vector<64x128xf32> to vector<64x128xbf16>
    %cst_15 = arith.constant dense<0.000000e+00> : vector<32x128xf32>
    %29 = tpu.matmul %26, %28, %cst_15 {dimension_numbers = #tpu.dot_dimension_numbers<[1], [0], [0], [1], [0, 0, 1, 1], [], []>} : vector<32x64xbf16>, vector<64x128xbf16>, vector<32x128xf32> -> vector<32x128xf32>
    %30 = vector.broadcast %27 : vector<32x1xf32> to vector<32x128xf32>
    %31 = arith.addf %29, %30 : vector<32x128xf32>
    %cst_16 = arith.constant 0.000000e+00 : f32
    %32 = vector.broadcast %cst_16 : f32 to vector<32x128xf32>
    %33 = arith.maximumf %31, %32 : vector<32x128xf32>
    %c0_17 = arith.constant 0 : index
    %c5 = arith.constant 5 : index
    %34 = vector.load %arg2[%c0_17, %c5] : memref<128x8xf32, #tpu.memory_space<vmem>>, vector<32x1xf32>
    %c0_18 = arith.constant 0 : index
    %c6 = arith.constant 6 : index
    %35 = vector.load %arg2[%c0_18, %c6] : memref<128x8xf32, #tpu.memory_space<vmem>>, vector<1x1xf32>
    %36 = vector.broadcast %34 : vector<32x1xf32> to vector<32x128xf32>
    %37 = arith.mulf %33, %36 : vector<32x128xf32>
    %cst_19 = arith.constant dense<0.000000e+00> : vector<128xf32>
    %38 = vector.multi_reduction <add>, %37, %cst_19 [0] : vector<32x128xf32> to vector<128xf32>
    %39 = vector.shape_cast %38 : vector<128xf32> to vector<1x128xf32>
    %40 = vector.broadcast %35 : vector<1x1xf32> to vector<1x128xf32>
    %41 = arith.addf %39, %40 : vector<1x128xf32>
    %c0_20 = arith.constant 0 : index
    %c0_21 = arith.constant 0 : index
    %42 = vector.load %arg4[%c0_20, %c0_21] : memref<1x128xf32, #tpu.memory_space<vmem>>, vector<1x128xf32>
    tpu.vector_store %arg4[%c0_20, %c0_21], %41 {strides = array<i32>} : memref<1x128xf32, #tpu.memory_space<vmem>>, vector<1x128xf32>,
    return
  }
  func.func @transform_0(%arg0: i32) -> (i32, i32) {
    %c0_i32 = arith.constant 0 : i32
    %c0_i32_0 = arith.constant 0 : i32
    return %c0_i32, %arg0 : i32, i32
  }
  func.func @transform_1(%arg0: i32) -> (i32, i32) {
    %c0_i32 = arith.constant 0 : i32
    %c0_i32_0 = arith.constant 0 : i32
    %c0_i32_1 = arith.constant 0 : i32
    return %c0_i32, %c0_i32_0 : i32, i32
  }
  func.func @transform_2(%arg0: i32) -> (i32, i32) {
    %c0_i32 = arith.constant 0 : i32
    %c0_i32_0 = arith.constant 0 : i32
    %c0_i32_1 = arith.constant 0 : i32
    return %c0_i32, %c0_i32_0 : i32, i32
  }
  func.func @transform_3(%arg0: i32) -> (i32, i32) {
    %c0_i32 = arith.constant 0 : i32
    %c0_i32_0 = arith.constant 0 : i32
    return %c0_i32, %arg0 : i32, i32
  }
}

</mosaic_0001>

<llo_original>
// kernel: tpu_custom_call.1
$region0: #{tpu_custom_call.1}
  #allocation0 [shape = 'u32[]', space=smem, size = 0x4, offset = 0x4, fixed_abs, tag = 'smem constant byte address 0x4 - core index']
  #allocation1 [shape = 'u32[144,128]{1,0:T(1,128)}', space=vmem, size = 0x12000, scoped, tag = 'internal scratch']
  %s0 = inlined_call_operand.vmem [shape: f32[1,128], index: 0, kind: input, shape index: {}]
  %s1 = inlined_call_operand.vmem [shape: f32[128,8], index: 1, kind: input, shape index: {}]
  %s2 = inlined_call_operand.vmem [shape: bf16[224,128], index: 2, kind: input, shape index: {}]
  %s3 = inlined_call_operand.hbm [shape: f32[1,128], index: 3, kind: output, shape index: {}]
  %s4 = sld [smem:[#allocation0]]
  $region22: #{tpu_custom_call.1} parent=0
    _
  %s6 = ssub.s32 1, %s4
  %s7 = scalar_select 0, %s6, %s4
  $region1: #{tpu_custom_call.1} parent=0
    #allocation2 [shape = 'u8[512]{0}', space=vmem, size = 0x400, scoped, tag = 'output window, operand 0, single buffered']
    #allocation3 [shape = 's32[1]{0}', space=sflag, size = 0x4, scoped, tag = 'scoped memory for tpu_custom_call.1']
    %8 = vsyncpa [#allocation3], 0
    // Predicated region
    $region2: #{tpu_custom_call.1} parent=1 // pred_check
      _
    $region3: #{tpu_custom_call.1} parent=1 // pred_check_branch
      %10 = sbr.rel (0) target = $region5
    $region4: #{tpu_custom_call.1} parent=1 // pred_region
      _
    $region5: #{tpu_custom_call.1} parent=1 // pred_fallthru
      _
    // Predicated region
    $region6: #{tpu_custom_call.1} parent=1 // pred_check
      _
    $region7: #{tpu_custom_call.1} parent=1 // pred_check_branch
      %12 = sbr.rel (0) target = $region9
    $region8: #{tpu_custom_call.1} parent=1 // pred_region
      _
    $region9: #{tpu_custom_call.1} parent=1 // pred_fallthru
      _
    // Predicated region
    $region10: #{tpu_custom_call.1} parent=1 // pred_check
      _
    $region11: #{tpu_custom_call.1} parent=1 // pred_check_branch
      %14 = sbr.rel (0) target = $region13
    $region12: #{tpu_custom_call.1} parent=1 // pred_region
      _
    $region13: #{tpu_custom_call.1} parent=1 // pred_fallthru
      _
    %v16 = vld [vmem:[%s0] sm:$0x1]
    %v17 = vld [vmem:[%s1] sm:$0xff]
    %v18 = vld [vmem:[%s1 + $0x8] sm:$0xff]
    %v19 = vld [vmem:[%s1 + $0x10] sm:$0xff]
    %v20 = vld [vmem:[%s1 + $0x18] sm:$0xff]
    %v21 = vld [vmem:[%s1 + $0x20] sm:$0xff]
    %v22 = vld [vmem:[%s1 + $0x28] sm:$0xff]
    %v23 = vld [vmem:[%s1 + $0x30] sm:$0xff]
    %v24 = vld [vmem:[%s1 + $0x38] sm:$0xff]
    %26 = vset.pattern.permute.xlu0 1
    %27 = vperm.xlu0 %26, %v17
    %v28 = vpop.permute.xlu0 %27
    %31 = vset.pattern.permute.xlu0 1
    %32 = vperm.xlu0 %31, %v18
    %v33 = vpop.permute.xlu0 %32
    %36 = vset.pattern.permute.xlu0 1
    %37 = vperm.xlu0 %36, %v19
    %v38 = vpop.permute.xlu0 %37
    %41 = vset.pattern.permute.xlu0 1
    %42 = vperm.xlu0 %41, %v20
    %v43 = vpop.permute.xlu0 %42
    %46 = vset.pattern.permute.xlu0 1
    %47 = vperm.xlu0 %46, %v21
    %v48 = vpop.permute.xlu0 %47
    %51 = vset.pattern.permute.xlu0 1
    %52 = vperm.xlu0 %51, %v22
    %v53 = vpop.permute.xlu0 %52
    %56 = vset.pattern.permute.xlu0 1
    %57 = vperm.xlu0 %56, %v23
    %v58 = vpop.permute.xlu0 %57
    %61 = vset.pattern.permute.xlu0 1
    %62 = vperm.xlu0 %61, %v24
    %v63 = vpop.permute.xlu0 %62
    %v66 = vlaneseq
    %v67 = vshrl.u32 %v66, 7
    %v68 = vsub.s32 0, %v67
    %v69 = vrot.slane %v16, %v68
    %v71 = vmul.f32 %v28, %v69
    %v72 = vmul.f32 %v33, %v69
    %v73 = vmul.f32 %v38, %v69
    %v74 = vmul.f32 %v43, %v69
    %v75 = vmul.f32 %v48, %v69
    %v76 = vmul.f32 %v53, %v69
    %v77 = vmul.f32 %v58, %v69
    %v78 = vmul.f32 %v63, %v69
    %79 = vset.pattern.permute.xlu0 2
    %80 = vperm.xlu0 %79, %v17
    %v81 = vpop.permute.xlu0 %80
    %83 = vset.pattern.permute.xlu0 2
    %84 = vperm.xlu0 %83, %v18
    %v85 = vpop.permute.xlu0 %84
    %87 = vset.pattern.permute.xlu0 2
    %88 = vperm.xlu0 %87, %v19
    %v89 = vpop.permute.xlu0 %88
    %91 = vset.pattern.permute.xlu0 2
    %92 = vperm.xlu0 %91, %v20
    %v93 = vpop.permute.xlu0 %92
    %95 = vset.pattern.permute.xlu0 2
    %96 = vperm.xlu0 %95, %v21
    %v97 = vpop.permute.xlu0 %96
    %99 = vset.pattern.permute.xlu0 2
    %100 = vperm.xlu0 %99, %v22
    %v101 = vpop.permute.xlu0 %100
    %103 = vset.pattern.permute.xlu0 2
    %104 = vperm.xlu0 %103, %v23
    %v105 = vpop.permute.xlu0 %104
    %107 = vset.pattern.permute.xlu0 2
    %108 = vperm.xlu0 %107, %v24
    %v109 = vpop.permute.xlu0 %108
    %v111 = vadd.f32 %v71, %v81
    %v112 = vadd.f32 %v72, %v85
    %v113 = vadd.f32 %v73, %v89
    %v114 = vadd.f32 %v74, %v93
    %v115 = vadd.f32 %v75, %v97
    %v116 = vadd.f32 %v76, %v101
    %v117 = vadd.f32 %v77, %v105
    %v118 = vadd.f32 %v78, %v109
    %v119 = vmax.f32 %v111, 0.0
    %v120 = vmax.f32 %v112, 0.0
    %v121 = vmax.f32 %v113, 0.0
    %v122 = vmax.f32 %v114, 0.0
    %v123 = vmax.f32 %v115, 0.0
    %v124 = vmax.f32 %v116, 0.0
    %v125 = vmax.f32 %v117, 0.0
    %v126 = vmax.f32 %v118, 0.0
    %v127 = vld [vmem:[%s2] sm:$0xf]
    %v128 = vld [vmem:[%s2 + $0x4] sm:$0xf]
    %v129 = vld [vmem:[%s2 + $0x8] sm:$0xf]
    %v130 = vld [vmem:[%s2 + $0xc] sm:$0xf]
    %v131 = vld [vmem:[%s2 + $0x10] sm:$0xf]
    %v132 = vld [vmem:[%s2 + $0x14] sm:$0xf]
    %v133 = vld [vmem:[%s2 + $0x18] sm:$0xf]
    %v134 = vld [vmem:[%s2 + $0x1c] sm:$0xf]
    %v135 = vld [vmem:[%s2 + $0x20] sm:$0xf]
    %v136 = vld [vmem:[%s2 + $0x24] sm:$0xf]
    %v137 = vld [vmem:[%s2 + $0x28] sm:$0xf]
    %v138 = vld [vmem:[%s2 + $0x2c] sm:$0xf]
    %v139 = vld [vmem:[%s2 + $0x30] sm:$0xf]
    %v140 = vld [vmem:[%s2 + $0x34] sm:$0xf]
    %v141 = vld [vmem:[%s2 + $0x38] sm:$0xf]
    %v142 = vld [vmem:[%s2 + $0x3c] sm:$0xf]
    %v143 = vld [vmem:[%s1] sm:$0xff]
    %v144 = vld [vmem:[%s1 + $0x8] sm:$0xff]
    %v145 = vld [vmem:[%s1 + $0x10] sm:$0xff]
    %v146 = vld [vmem:[%s1 + $0x18] sm:$0xff]
    %v147 = vld [vmem:[%s1 + $0x20] sm:$0xff]
    %v148 = vld [vmem:[%s1 + $0x28] sm:$0xff]
    %v149 = vld [vmem:[%s1 + $0x30] sm:$0xff]
    %v150 = vld [vmem:[%s1 + $0x38] sm:$0xff]
    %v151 = vld [vmem:[%s1 + $0x40] sm:$0xff]
    %v152 = vld [vmem:[%s1 + $0x48] sm:$0xff]
    %v153 = vld [vmem:[%s1 + $0x50] sm:$0xff]
    %v154 = vld [vmem:[%s1 + $0x58] sm:$0xff]
    %v155 = vld [vmem:[%s1 + $0x60] sm:$0xff]
    %v156 = vld [vmem:[%s1 + $0x68] sm:$0xff]
    %v157 = vld [vmem:[%s1 + $0x70] sm:$0xff]
    %v158 = vld [vmem:[%s1 + $0x78] sm:$0xff]
    %v159 = vpack.c.bf16 %v120, %v119
    %v160 = vpack.c.bf16 %v122, %v121
    %v161 = vpack.c.bf16 %v124, %v123
    %v162 = vpack.c.bf16 %v126, %v125
    %164 = vset.pattern.permute.xlu0 0
    %165 = vperm.xlu0 %164, %v143
    %v166 = vpop.permute.xlu0 %165
    %169 = vset.pattern.permute.xlu0 0
    %170 = vperm.xlu0 %169, %v144
    %v171 = vpop.permute.xlu0 %170
    %174 = vset.pattern.permute.xlu0 0
    %175 = vperm.xlu0 %174, %v145
    %v176 = vpop.permute.xlu0 %175
    %179 = vset.pattern.permute.xlu0 0
    %180 = vperm.xlu0 %179, %v146
    %v181 = vpop.permute.xlu0 %180
    %184 = vset.pattern.permute.xlu0 0
    %185 = vperm.xlu0 %184, %v147
    %v186 = vpop.permute.xlu0 %185
    %189 = vset.pattern.permute.xlu0 0
    %190 = vperm.xlu0 %189, %v148
    %v191 = vpop.permute.xlu0 %190
    %194 = vset.pattern.permute.xlu0 0
    %195 = vperm.xlu0 %194, %v149
    %v196 = vpop.permute.xlu0 %195
    %199 = vset.pattern.permute.xlu0 0
    %200 = vperm.xlu0 %199, %v150
    %v201 = vpop.permute.xlu0 %200
    %204 = vset.pattern.permute.xlu0 0
    %205 = vperm.xlu0 %204, %v151
    %v206 = vpop.permute.xlu0 %205
    %209 = vset.pattern.permute.xlu0 0
    %210 = vperm.xlu0 %209, %v152
    %v211 = vpop.permute.xlu0 %210
    %214 = vset.pattern.permute.xlu0 0
    %215 = vperm.xlu0 %214, %v153
    %v216 = vpop.permute.xlu0 %215
    %219 = vset.pattern.permute.xlu0 0
    %220 = vperm.xlu0 %219, %v154
    %v221 = vpop.permute.xlu0 %220
    %224 = vset.pattern.permute.xlu0 0
    %225 = vperm.xlu0 %224, %v155
    %v226 = vpop.permute.xlu0 %225
    %229 = vset.pattern.permute.xlu0 0
    %230 = vperm.xlu0 %229, %v156
    %v231 = vpop.permute.xlu0 %230
    %234 = vset.pattern.permute.xlu0 0
    %235 = vperm.xlu0 %234, %v157
    %v236 = vpop.permute.xlu0 %235
    %239 = vset.pattern.permute.xlu0 0
    %240 = vperm.xlu0 %239, %v158
    %v241 = vpop.permute.xlu0 %240
    %v259 = vunpack.c.l.b16 %v127
    %v260 = vunpack.c.l.b16 %v128
    %v261 = vunpack.c.l.b16 %v129
    %v262 = vunpack.c.l.b16 %v130
    %v263 = vunpack.c.l.b16 %v131
    %v264 = vunpack.c.l.b16 %v132
    %v265 = vunpack.c.l.b16 %v133
    %v266 = vunpack.c.l.b16 %v134
    %v267 = vunpack.c.l.b16 %v135
    %v268 = vunpack.c.l.b16 %v136
    %v269 = vunpack.c.l.b16 %v137
    %v270 = vunpack.c.l.b16 %v138
    %v271 = vunpack.c.l.b16 %v139
    %v272 = vunpack.c.l.b16 %v140
    %v273 = vunpack.c.l.b16 %v141
    %v274 = vunpack.c.l.b16 %v142
    %v275 = vpack.c.b16 %v260, %v259
    %v276 = vpack.c.b16 %v262, %v261
    %v277 = vpack.c.b16 %v264, %v263
    %v278 = vpack.c.b16 %v266, %v265
    %v279 = vpack.c.b16 %v268, %v267
    %v280 = vpack.c.b16 %v270, %v269
    %v281 = vpack.c.b16 %v272, %v271
    %v282 = vpack.c.b16 %v274, %v273
    %vm283 = vcmask 523264
    %v285 = vsel %vm283, %v275, 0
    %v288 = vsel %vm283, %v276, 0
    %v291 = vsel %vm283, %v277, 0
    %v294 = vsel %vm283, %v278, 0
    %v297 = vsel %vm283, %v279, 0
    %v300 = vsel %vm283, %v280, 0
    %v303 = vsel %vm283, %v281, 0
    %v306 = vsel %vm283, %v282, 0
    %308 = vmatprep.subr.bf16.mxu0 0
    %309 = vmatpush1.bf16.msra.mxu0 0
    %310 = vmatprep.subr.bf16.mxu0 0
    %311 = vmatpush1.bf16.msra.mxu0 0
    %312 = vmatprep.subr.bf16.mxu0 0
    %313 = vmatpush1.bf16.msra.mxu0 0
    %314 = vmatprep.subr.bf16.mxu0 0
    %315 = vmatpush1.bf16.msra.mxu0 0
    %316 = vmatprep.subr.bf16.mxu0 0
    %317 = vmatpush1.bf16.msra.mxu0 %v162
    %318 = vmatprep.subr.bf16.mxu0 0
    %319 = vmatpush1.bf16.msra.mxu0 %v161
    %320 = vmatprep.subr.bf16.mxu0 0
    %321 = vmatpush1.bf16.msra.mxu0 %v160
    %322 = vmatprep.subr.bf16.mxu0 0
    %323 = vmatpush1.bf16.msra.mxu0 %v159
    %324 = vmatprep.subr.bf16.mxu0 0
    %325 = vmatpush2.bf16.msra.mxu0 0
    %326 = vmatprep.subr.bf16.mxu0 0
    %327 = vmatpush2.bf16.msra.mxu0 0
    %328 = vmatprep.subr.bf16.mxu0 0
    %329 = vmatpush2.bf16.msra.mxu0 0
    %330 = vmatprep.subr.bf16.mxu0 0
    %331 = vmatpush2.bf16.msra.mxu0 0
    %332 = vmatprep.subr.bf16.mxu0 0
    %333 = vmatpush2.bf16.msra.mxu0 0
    %334 = vmatprep.subr.bf16.mxu0 0
    %335 = vmatpush2.bf16.msra.mxu0 0
    %336 = vmatprep.subr.bf16.mxu0 0
    %337 = vmatpush2.bf16.msra.mxu0 0
    %338 = vmatprep.subr.bf16.mxu0 0
    %339 = vmatpush2.bf16.msra.mxu0 0
    %340 = vmatprep.mubr.bf16.mxu0 0
    %341 = vmatmul.mubr.bf16.gmra.mxu0 %v285
    %v342 = vpop.f32.mrf.mxu0
    %v343 = vadd.f32 %v166, %v342
    %v344 = vpop.f32.mrf.mxu0
    %v345 = vpop.f32.mrf.mxu0
    %v346 = vadd.f32 %v171, %v345
    %v347 = vpop.f32.mrf.mxu0
    %348 = vmatprep.mubr.bf16.mxu0 0
    %349 = vmatmul.mubr.bf16.gmra.mxu0 %v288
    %v350 = vpop.f32.mrf.mxu0
    %v351 = vadd.f32 %v176, %v350
    %v352 = vpop.f32.mrf.mxu0
    %v353 = vpop.f32.mrf.mxu0
    %v354 = vadd.f32 %v181, %v353
    %v355 = vpop.f32.mrf.mxu0
    %356 = vmatprep.mubr.bf16.mxu0 0
    %357 = vmatmul.mubr.bf16.gmra.mxu0 %v291
    %v358 = vpop.f32.mrf.mxu0
    %v359 = vadd.f32 %v186, %v358
    %v360 = vpop.f32.mrf.mxu0
    %v361 = vpop.f32.mrf.mxu0
    %v362 = vadd.f32 %v191, %v361
    %v363 = vpop.f32.mrf.mxu0
    %364 = vmatprep.mubr.bf16.mxu0 0
    %365 = vmatmul.mubr.bf16.gmra.mxu0 %v294
    %v366 = vpop.f32.mrf.mxu0
    %v367 = vadd.f32 %v196, %v366
    %v368 = vpop.f32.mrf.mxu0
    %v369 = vpop.f32.mrf.mxu0
    %v370 = vadd.f32 %v201, %v369
    %v371 = vpop.f32.mrf.mxu0
    %372 = vmatprep.mubr.bf16.mxu0 0
    %373 = vmatmul.mubr.bf16.gmra.mxu0 %v297
    %v374 = vpop.f32.mrf.mxu0
    %v375 = vadd.f32 %v206, %v374
    %v376 = vpop.f32.mrf.mxu0
    %v377 = vpop.f32.mrf.mxu0
    %v378 = vadd.f32 %v211, %v377
    %v379 = vpop.f32.mrf.mxu0
    %380 = vmatprep.mubr.bf16.mxu0 0
    %381 = vmatmul.mubr.bf16.gmra.mxu0 %v300
    %v382 = vpop.f32.mrf.mxu0
    %v383 = vadd.f32 %v216, %v382
    %v384 = vpop.f32.mrf.mxu0
    %v385 = vpop.f32.mrf.mxu0
    %v386 = vadd.f32 %v221, %v385
    %v387 = vpop.f32.mrf.mxu0
    %388 = vmatprep.mubr.bf16.mxu0 0
    %389 = vmatmul.mubr.bf16.gmra.mxu0 %v303
    %v390 = vpop.f32.mrf.mxu0
    %v391 = vadd.f32 %v226, %v390
    %v392 = vpop.f32.mrf.mxu0
    %v393 = vpop.f32.mrf.mxu0
    %v394 = vadd.f32 %v231, %v393
    %v395 = vpop.f32.mrf.mxu0
    %396 = vmatprep.mubr.bf16.mxu0 0
    %397 = vmatmul.mubr.bf16.gmra.mxu0 %v306
    %v398 = vpop.f32.mrf.mxu0
    %v399 = vadd.f32 %v236, %v398
    %v400 = vpop.f32.mrf.mxu0
    %v401 = vpop.f32.mrf.mxu0
    %v402 = vadd.f32 %v241, %v401
    %v403 = vpop.f32.mrf.mxu0
    %404 = vdwg.mxu0
    %v405 = vmax.f32 %v343, 0.0
    %v406 = vmax.f32 %v346, 0.0
    %v407 = vmax.f32 %v351, 0.0
    %v408 = vmax.f32 %v354, 0.0
    %v409 = vmax.f32 %v359, 0.0
    %v410 = vmax.f32 %v362, 0.0
    %v411 = vmax.f32 %v367, 0.0
    %v412 = vmax.f32 %v370, 0.0
    %v413 = vmax.f32 %v375, 0.0
    %v414 = vmax.f32 %v378, 0.0
    %v415 = vmax.f32 %v383, 0.0
    %v416 = vmax.f32 %v386, 0.0
    %v417 = vmax.f32 %v391, 0.0
    %v418 = vmax.f32 %v394, 0.0
    %v419 = vmax.f32 %v399, 0.0
    %v420 = vmax.f32 %v402, 0.0
    %v421 = vld [vmem:[%s2 + $0x40] sm:$0xf]
    %v422 = vld [vmem:[%s2 + $0x44] sm:$0xf]
    %v423 = vld [vmem:[%s2 + $0x48] sm:$0xf]
    %v424 = vld [vmem:[%s2 + $0x4c] sm:$0xf]
    %v425 = vld [vmem:[%s2 + $0x50] sm:$0xf]
    %v426 = vld [vmem:[%s2 + $0x54] sm:$0xf]
    %v427 = vld [vmem:[%s2 + $0x58] sm:$0xf]
    %v428 = vld [vmem:[%s2 + $0x5c] sm:$0xf]
    %v429 = vpack.c.bf16 %v406, %v405
    %v430 = vpack.c.bf16 %v408, %v407
    %v431 = vpack.c.bf16 %v410, %v409
    %v432 = vpack.c.bf16 %v412, %v411
    %v433 = vpack.c.bf16 %v414, %v413
    %v434 = vpack.c.bf16 %v416, %v415
    %v435 = vpack.c.bf16 %v418, %v417
    %v436 = vpack.c.bf16 %v420, %v419
    %437 = vset.pattern.permute.xlu0 3
    %438 = vperm.xlu0 %437, %v17
    %v439 = vpop.permute.xlu0 %438
    %441 = vset.pattern.permute.xlu0 3
    %442 = vperm.xlu0 %441, %v18
    %v443 = vpop.permute.xlu0 %442
    %445 = vset.pattern.permute.xlu0 3
    %446 = vperm.xlu0 %445, %v19
    %v447 = vpop.permute.xlu0 %446
    %449 = vset.pattern.permute.xlu0 3
    %450 = vperm.xlu0 %449, %v20
    %v451 = vpop.permute.xlu0 %450
    %453 = vset.pattern.permute.xlu0 3
    %454 = vperm.xlu0 %453, %v21
    %v455 = vpop.permute.xlu0 %454
    %457 = vset.pattern.permute.xlu0 3
    %458 = vperm.xlu0 %457, %v22
    %v459 = vpop.permute.xlu0 %458
    %461 = vset.pattern.permute.xlu0 3
    %462 = vperm.xlu0 %461, %v23
    %v463 = vpop.permute.xlu0 %462
    %465 = vset.pattern.permute.xlu0 3
    %466 = vperm.xlu0 %465, %v24
    %v467 = vpop.permute.xlu0 %466
    %v477 = vunpack.c.l.b16 %v421
    %v478 = vunpack.c.l.b16 %v422
    %v479 = vunpack.c.l.b16 %v423
    %v480 = vunpack.c.l.b16 %v424
    %v481 = vunpack.c.l.b16 %v425
    %v482 = vunpack.c.l.b16 %v426
    %v483 = vunpack.c.l.b16 %v427
    %v484 = vunpack.c.l.b16 %v428
    %v485 = vpack.c.b16 %v478, %v477
    %v486 = vpack.c.b16 %v480, %v479
    %v487 = vpack.c.b16 %v482, %v481
    %v488 = vpack.c.b16 %v484, %v483
    %493 = vmatprep.subr.bf16.mxu0 0
    %494 = vmatpush1.bf16.msra.mxu0 %v436
    %495 = vmatprep.subr.bf16.mxu0 0
    %496 = vmatpush1.bf16.msra.mxu0 %v435
    %497 = vmatprep.subr.bf16.mxu0 0
    %498 = vmatpush1.bf16.msra.mxu0 %v434
    %499 = vmatprep.subr.bf16.mxu0 0
    %500 = vmatpush1.bf16.msra.mxu0 %v433
    %501 = vmatprep.subr.bf16.mxu0 0
    %502 = vmatpush1.bf16.msra.mxu0 %v432
    %503 = vmatprep.subr.bf16.mxu0 0
    %504 = vmatpush1.bf16.msra.mxu0 %v431
    %505 = vmatprep.subr.bf16.mxu0 0
    %506 = vmatpush1.bf16.msra.mxu0 %v430
    %507 = vmatprep.subr.bf16.mxu0 0
    %508 = vmatpush1.bf16.msra.mxu0 %v429
    %509 = vmatprep.subr.bf16.mxu0 0
    %510 = vmatpush2.bf16.msra.mxu0 0
    %511 = vmatprep.subr.bf16.mxu0 0
    %512 = vmatpush2.bf16.msra.mxu0 0
    %513 = vmatprep.subr.bf16.mxu0 0
    %514 = vmatpush2.bf16.msra.mxu0 0
    %515 = vmatprep.subr.bf16.mxu0 0
    %516 = vmatpush2.bf16.msra.mxu0 0
    %517 = vmatprep.subr.bf16.mxu0 0
    %518 = vmatpush2.bf16.msra.mxu0 0
    %519 = vmatprep.subr.bf16.mxu0 0
    %520 = vmatpush2.bf16.msra.mxu0 0
    %521 = vmatprep.subr.bf16.mxu0 0
    %522 = vmatpush2.bf16.msra.mxu0 0
    %523 = vmatprep.subr.bf16.mxu0 0
    %524 = vmatpush2.bf16.msra.mxu0 0
    %525 = vmatprep.mubr.bf16.mxu0 0
    %526 = vmatmul.mubr.bf16.gmra.mxu0 %v485
    %v527 = vpop.f32.mrf.mxu0
    %v528 = vadd.f32 %v439, %v527
    %v529 = vpop.f32.mrf.mxu0
    %v530 = vpop.f32.mrf.mxu0
    %v531 = vadd.f32 %v443, %v530
    %v532 = vpop.f32.mrf.mxu0
    %533 = vmatprep.mubr.bf16.mxu0 0
    %534 = vmatmul.mubr.bf16.gmra.mxu0 %v486
    %v535 = vpop.f32.mrf.mxu0
    %v536 = vadd.f32 %v447, %v535
    %v537 = vpop.f32.mrf.mxu0
    %v538 = vpop.f32.mrf.mxu0
    %v539 = vadd.f32 %v451, %v538
    %v540 = vpop.f32.mrf.mxu0
    %541 = vmatprep.mubr.bf16.mxu0 0
    %542 = vmatmul.mubr.bf16.gmra.mxu0 %v487
    %v543 = vpop.f32.mrf.mxu0
    %v544 = vadd.f32 %v455, %v543
    %v545 = vpop.f32.mrf.mxu0
    %v546 = vpop.f32.mrf.mxu0
    %v547 = vadd.f32 %v459, %v546
    %v548 = vpop.f32.mrf.mxu0
    %549 = vmatprep.mubr.bf16.mxu0 0
    %550 = vmatmul.mubr.bf16.gmra.mxu0 %v488
    %v551 = vpop.f32.mrf.mxu0
    %v552 = vadd.f32 %v463, %v551
    %v553 = vpop.f32.mrf.mxu0
    %v554 = vpop.f32.mrf.mxu0
    %v555 = vadd.f32 %v467, %v554
    %v556 = vpop.f32.mrf.mxu0
    %557 = vdwg.mxu0
    %v558 = vmax.f32 %v528, 0.0
    %v559 = vmax.f32 %v531, 0.0
    %v560 = vmax.f32 %v536, 0.0
    %v561 = vmax.f32 %v539, 0.0
    %v562 = vmax.f32 %v544, 0.0
    %v563 = vmax.f32 %v547, 0.0
    %v564 = vmax.f32 %v552, 0.0
    %v565 = vmax.f32 %v555, 0.0
    %v566 = vld [vmem:[%s2 + $0x60] sm:$0xf]
    %v567 = vld [vmem:[%s2 + $0x64] sm:$0xf]
    %v568 = vld [vmem:[%s2 + $0x68] sm:$0xf]
    %v569 = vld [vmem:[%s2 + $0x6c] sm:$0xf]
    %v570 = vld [vmem:[%s1] sm:$0xff]
    %v571 = vld [vmem:[%s1 + $0x8] sm:$0xff]
    %v572 = vld [vmem:[%s1 + $0x10] sm:$0xff]
    %v573 = vld [vmem:[%s1 + $0x18] sm:$0xff]
    %v574 = vpack.c.bf16 %v559, %v558
    %v575 = vpack.c.bf16 %v561, %v560
    %v576 = vpack.c.bf16 %v563, %v562
    %v577 = vpack.c.bf16 %v565, %v564
    %579 = vset.pattern.permute.xlu0 4
    %580 = vperm.xlu0 %579, %v570
    %v581 = vpop.permute.xlu0 %580
    %584 = vset.pattern.permute.xlu0 4
    %585 = vperm.xlu0 %584, %v571
    %v586 = vpop.permute.xlu0 %585
    %589 = vset.pattern.permute.xlu0 4
    %590 = vperm.xlu0 %589, %v572
    %v591 = vpop.permute.xlu0 %590
    %594 = vset.pattern.permute.xlu0 4
    %595 = vperm.xlu0 %594, %v573
    %v596 = vpop.permute.xlu0 %595
    %v602 = vunpack.c.l.b16 %v566
    %v603 = vunpack.c.l.b16 %v567
    %v604 = vunpack.c.l.b16 %v568
    %v605 = vunpack.c.l.b16 %v569
    %v606 = vpack.c.b16 %v603, %v602
    %v607 = vpack.c.b16 %v605, %v604
    %v609 = vsel %vm283, %v606, 0
    %v612 = vsel %vm283, %v607, 0
    %614 = vmatprep.subr.bf16.mxu0 0
    %615 = vmatpush1.bf16.msra.mxu0 0
    %616 = vmatprep.subr.bf16.mxu0 0
    %617 = vmatpush1.bf16.msra.mxu0 0
    %618 = vmatprep.subr.bf16.mxu0 0
    %619 = vmatpush1.bf16.msra.mxu0 0
    %620 = vmatprep.subr.bf16.mxu0 0
    %621 = vmatpush1.bf16.msra.mxu0 0
    %622 = vmatprep.subr.bf16.mxu0 0
    %623 = vmatpush1.bf16.msra.mxu0 %v577
    %624 = vmatprep.subr.bf16.mxu0 0
    %625 = vmatpush1.bf16.msra.mxu0 %v576
    %626 = vmatprep.subr.bf16.mxu0 0
    %627 = vmatpush1.bf16.msra.mxu0 %v575
    %628 = vmatprep.subr.bf16.mxu0 0
    %629 = vmatpush1.bf16.msra.mxu0 %v574
    %630 = vmatprep.subr.bf16.mxu0 0
    %631 = vmatpush2.bf16.msra.mxu0 0
    %632 = vmatprep.subr.bf16.mxu0 0
    %633 = vmatpush2.bf16.msra.mxu0 0
    %634 = vmatprep.subr.bf16.mxu0 0
    %635 = vmatpush2.bf16.msra.mxu0 0
    %636 = vmatprep.subr.bf16.mxu0 0
    %637 = vmatpush2.bf16.msra.mxu0 0
    %638 = vmatprep.subr.bf16.mxu0 0
    %639 = vmatpush2.bf16.msra.mxu0 0
    %640 = vmatprep.subr.bf16.mxu0 0
    %641 = vmatpush2.bf16.msra.mxu0 0
    %642 = vmatprep.subr.bf16.mxu0 0
    %643 = vmatpush2.bf16.msra.mxu0 0
    %644 = vmatprep.subr.bf16.mxu0 0
    %645 = vmatpush2.bf16.msra.mxu0 0
    %646 = vmatprep.mubr.bf16.mxu0 0
    %647 = vmatmul.mubr.bf16.gmra.mxu0 %v609
    %v648 = vpop.f32.mrf.mxu0
    %v649 = vadd.f32 %v581, %v648
    %v650 = vpop.f32.mrf.mxu0
    %v651 = vpop.f32.mrf.mxu0
    %v652 = vadd.f32 %v586, %v651
    %v653 = vpop.f32.mrf.mxu0
    %654 = vmatprep.mubr.bf16.mxu0 0
    %655 = vmatmul.mubr.bf16.gmra.mxu0 %v612
    %v656 = vpop.f32.mrf.mxu0
    %v657 = vadd.f32 %v591, %v656
    %v658 = vpop.f32.mrf.mxu0
    %v659 = vpop.f32.mrf.mxu0
    %v660 = vadd.f32 %v596, %v659
    %v661 = vpop.f32.mrf.mxu0
    %662 = vdwg.mxu0
    %v663 = vmax.f32 %v649, 0.0
    %v664 = vmax.f32 %v652, 0.0
    %v665 = vmax.f32 %v657, 0.0
    %v666 = vmax.f32 %v660, 0.0
    %v667 = vld [vmem:[%s1] sm:$0x1]
    %668 = vset.pattern.permute.xlu0 5
    %669 = vperm.xlu0 %668, %v570
    %v670 = vpop.permute.xlu0 %669
    %672 = vset.pattern.permute.xlu0 5
    %673 = vperm.xlu0 %672, %v571
    %v674 = vpop.permute.xlu0 %673
    %676 = vset.pattern.permute.xlu0 5
    %677 = vperm.xlu0 %676, %v572
    %v678 = vpop.permute.xlu0 %677
    %680 = vset.pattern.permute.xlu0 5
    %681 = vperm.xlu0 %680, %v573
    %v682 = vpop.permute.xlu0 %681
    %v684 = vmul.f32 %v663, %v670
    %v685 = vmul.f32 %v664, %v674
    %v686 = vmul.f32 %v665, %v678
    %v687 = vmul.f32 %v666, %v682
    %v688 = vadd.f32 %v684, %v685
    %v689 = vadd.f32 %v688, %v686
    %v690 = vadd.f32 %v689, %v687
    %v691 = vrot.slane %v690, 4
    %v692 = vadd.f32 %v690, %v691
    %v693 = vrot.slane %v692, 2
    %v694 = vadd.f32 %v692, %v693
    %v695 = vrot.slane %v694, 1
    %v696 = vadd.f32 %v694, %v695
    %698 = vset.pattern.permute.xlu0 6
    %699 = vperm.xlu0 %698, %v667
    %v700 = vpop.permute.xlu0 %699
    %v702 = vadd.f32 %v696, %v700
    %703 = vst [vmem:[#allocation2] sm:$0x1] %v702
    // Predicated region
    $region14: #{tpu_custom_call.1} parent=1 // pred_check
      _
    $region15: #{tpu_custom_call.1} parent=1 // pred_check_branch
      %705 = sbr.rel (0) target = $region17
    $region16: #{tpu_custom_call.1} parent=1 // pred_region
      %s707 = ssub.s32 16, 16
      %708 = vsyncadd [#allocation3], %s707
      %s710 = sshll.u32 [#allocation2], 4
      %s711 = int_to_ptr.vmem [resolvable:$true] %s710
      %713 = dma.vmem_to_hbm [thread:$0]  %s711, 16, %s3, [#allocation3]
    $region17: #{tpu_custom_call.1} parent=1 // pred_fallthru
      _
    // Predicated region
    $region18: #{tpu_custom_call.1} parent=1 // pred_check
      _
    $region19: #{tpu_custom_call.1} parent=1 // pred_check_branch
      %715 = sbr.rel (0) target = $region21
    $region20: #{tpu_custom_call.1} parent=1 // pred_region
      %716 = dma.done [#allocation3], 16
    $region21: #{tpu_custom_call.1} parent=1 // pred_fallthru
      _
    %717 = vsyncpa [#allocation3], 1

</llo_original>
